<compile_context>
chip_gen: v7x
topology: tpu7x:2x2x1
jax: 0.10.0
libtpu: 0.0.40
codegen_flags: <defaults>
</compile_context>

<pallas_src>
import functools
import math

import jax
import jax.numpy as jnp
from jax import lax
from jax.experimental import pallas as pl
from jax.experimental.pallas import tpu as pltpu


def _round_up(x: int, m: int) -> int:
    return (x + m - 1) // m * m


def _cdiv(a: int, b: int) -> int:
    return -(-a // b)


def _one_hot_k1_kernel(idx_ref, out_ref, *, v_tile: int, single_vtile: bool):
    # idx_ref: (row_tile, 1)      int32
    # out_ref: (row_tile, v_tile) float32 (lane slice of the vocab axis)
    rt, vt = out_ref.shape
    idx = idx_ref[...]                                   # (rt, 1)
    if not single_vtile:
        # Fold the vocab-tile offset into the narrow column (no wide add).
        idx = idx - pl.program_id(1) * v_tile
    lane = lax.broadcasted_iota(jnp.int32, (rt, vt), 1)  # local lane index
    # Out-of-range / negative ids never match a lane in [0, vt) -> zero row.
    out_ref[...] = (lane == idx).astype(out_ref.dtype)


def _one_hot_packed_kernel(idx_ref, e_ref, out_ref):
    # idx_ref: (row_tile, kc) int32 -- k packed ids, then a 1 (bias), then 0s
    # e_ref:   (kc, W)        f32   -- rows 0..k-1: segment indicators,
    #                                  row k: segment base (t*V), rest zero
    # out_ref: (row_tile, W)  f32   -- lane-dense packed one-hot rows
    rt, w = out_ref.shape
    # target[r, l] = idx[r, l // V] + (l // V) * V   (exact in f32, < 2^24)
    target = jnp.dot(idx_ref[...].astype(jnp.float32), e_ref[...],
                     preferred_element_type=jnp.float32)
    lane = lax.broadcasted_iota(jnp.int32, (rt, w), 1)
    # Sentinel -1 and out-of-range ids can never hit a lane of their segment.
    out_ref[...] = (lane == target.astype(jnp.int32)).astype(out_ref.dtype)


def one_hot_encoding(input_ids: jax.Array, nt_vocab_size: int,
                     *, target_block_bytes: int = 8 << 20) -> jax.Array:
    """Pallas equivalent of One_Hot_Encoding.forward.

    input_ids: (B, S) integer array.
    returns:   (B, S, nt_vocab_size) float32 one-hot array.
    """
    B, S = input_ids.shape
    V = int(nt_vocab_size)
    N = B * S

    # Pack k tokens per output row so the written lane width W is a multiple
    # of 128 (dense vst + dense HBM writeback) whenever V < 128.
    if V < 128:
        W = (V * 128) // math.gcd(V, 128)        # lcm(V, 128)
        k = W // V
    else:
        k, W = 1, V

    # Lane tile (k == 1 only): split very wide vocabularies into 128-multiples.
    v_tile = W
    if k == 1 and W % 128 == 0 and W > 8192:
        v_tile = next(c for c in (8192, 4096, 2048, 1024, 512, 256, 128) if W % c == 0)

    n_rows = _cdiv(N, k)

    # ---- input preparation (touches only N int32s: negligible HBM traffic) ----
    flat = input_ids.reshape(-1).astype(jnp.int32)
    if k == 1:
        idx_in = flat.reshape(n_rows, 1)
        in_cols = 1
        e_aug = None
        e_bytes = 0
    else:
        kc = _round_up(k + 1, 8)                 # tile-friendly contraction dim
        tail = n_rows * k - N                    # <= k-1 sentinel ids
        if tail:
            flat = jnp.concatenate([flat, jnp.full((tail,), -1, jnp.int32)])
        idx2d = flat.reshape(n_rows, k)
        extra = jnp.zeros((n_rows, kc - k), jnp.int32).at[:, 0].set(1)  # bias col
        idx_in = jnp.concatenate([idx2d, extra], axis=1)                # (n_rows, kc)
        in_cols = kc

        seg = jnp.arange(W, dtype=jnp.int32) // V                       # (W,)
        e = (seg[None, :] == jnp.arange(k, dtype=jnp.int32)[:, None]).astype(jnp.float32)
        e_base = (seg * V).astype(jnp.float32)[None, :]
        e_zero = jnp.zeros((kc - k - 1, W), jnp.float32)
        e_aug = jnp.concatenate([e, e_base, e_zero], axis=0)             # (kc, W)
        e_bytes = kc * W * 4

    # ---- row tile: balanced blocks, no row padding (ragged edge is clipped) ----
    avail = (40 << 20) - 2 * e_bytes                       # leave room for E (x2 buf)
    out_budget = min(target_block_bytes, max(1 << 20, avail // 2))
    budget_rows = max(8, (out_budget // (v_tile * 4)) // 8 * 8)
    steps = _cdiv(n_rows, budget_rows)
    row_tile = _round_up(_cdiv(n_rows, steps), 8)
    if row_tile >= n_rows:
        row_tile = n_rows                                  # single full-array block
    grid_rows = _cdiv(n_rows, row_tile)

    out_block_bytes = row_tile * v_tile * 4
    in_block_bytes = row_tile * in_cols * 4
    vmem_limit = 2 * out_block_bytes + 2 * in_block_bytes + 2 * e_bytes + (4 << 20)
    vmem_limit = int(min(max(vmem_limit, 16 << 20), 48 << 20))

    if k == 1:
        grid = (grid_rows, W // v_tile)                    # vocab axis innermost:
        out = pl.pallas_call(                              # idx block not re-DMA'd
            functools.partial(_one_hot_k1_kernel, v_tile=v_tile,
                              single_vtile=(W == v_tile)),
            out_shape=jax.ShapeDtypeStruct((n_rows, W), jnp.float32),
            grid=grid,
            in_specs=[pl.BlockSpec((row_tile, 1), lambda i, j: (i, 0))],
            out_specs=pl.BlockSpec((row_tile, v_tile), lambda i, j: (i, j)),
            compiler_params=pltpu.CompilerParams(
                dimension_semantics=("parallel", "parallel"),
                vmem_limit_bytes=vmem_limit),
        )(idx_in)
        return out.reshape(B, S, V)                        # pure reshape, no copy

    out = pl.pallas_call(
        _one_hot_packed_kernel,
        out_shape=jax.ShapeDtypeStruct((n_rows, W), jnp.float32),
        grid=(grid_rows,),
        in_specs=[pl.BlockSpec((row_tile, in_cols), lambda i: (i, 0)),
                  pl.BlockSpec((in_cols, W), lambda i: (0, 0))],
        out_specs=pl.BlockSpec((row_tile, W), lambda i: (i, 0)),
        compiler_params=pltpu.CompilerParams(
            dimension_semantics=("parallel",),
            vmem_limit_bytes=vmem_limit),
    )(idx_in, e_aug)

    # (n_rows, k*V) -> (n_rows*k, V) is a pure row-major reshape.
    out = out.reshape(n_rows * k, V)
    if n_rows * k != N:       # only a <= (k-1)-token tail forces the slice copy
        out = out[:N]
    return out.reshape(B, S, V)


if __name__ == "__main__":
    key = jax.random.PRNGKey(0)

    # 1) Primary example matching the module spec: batch=2, seq=8, vocab=32.
    B, S, V = 2, 8, 32
    input_ids = jax.random.randint(key, (B, S), 0, V, dtype=jnp.int32)
    result = jax.block_until_ready(one_hot_encoding(input_ids, V))
    ref = jax.nn.one_hot(input_ids, V, dtype=jnp.float32)
    assert result.shape == (B, S, V)
    assert result.dtype == jnp.float32
    assert jnp.array_equal(result, ref)

    # 2) Packed path with ragged tail (N % k != 0), odd-ish V.
    B2, S2, V2 = 3, 7, 40
    ids2 = jax.random.randint(jax.random.PRNGKey(1), (B2, S2), 0, V2, dtype=jnp.int32)
    res2 = jax.block_until_ready(one_hot_encoding(ids2, V2))
    assert jnp.array_equal(res2, jax.nn.one_hot(ids2, V2, dtype=jnp.float32))

    # 3) V >= 128 path (no packing, k == 1).
    B3, S3, V3 = 2, 8, 256
    ids3 = jax.random.randint(jax.random.PRNGKey(2), (B3, S3), 0, V3, dtype=jnp.int32)
    res3 = jax.block_until_ready(one_hot_encoding(ids3, V3))
    assert jnp.array_equal(res3, jax.nn.one_hot(ids3, V3, dtype=jnp.float32))

    # 4) Ragged-edge block clipping on the k == 1 path (forced tiny row tile).
    B4, S4, V4 = 5, 5, 128
    ids4 = jax.random.randint(jax.random.PRNGKey(3), (B4, S4), 0, V4, dtype=jnp.int32)
    res4 = jax.block_until_ready(one_hot_encoding(ids4, V4, target_block_bytes=4096))
    assert jnp.array_equal(res4, jax.nn.one_hot(ids4, V4, dtype=jnp.float32))

    # 5) Ragged-edge block clipping on the packed path (N % k == 0, no slice).
    B5, S5, V5 = 2, 50, 32
    ids5 = jax.random.randint(jax.random.PRNGKey(4), (B5, S5), 0, V5, dtype=jnp.int32)
    res5 = jax.block_until_ready(one_hot_encoding(ids5, V5, target_block_bytes=4096))
    assert jnp.array_equal(res5, jax.nn.one_hot(ids5, V5, dtype=jnp.float32))

    print("KERNEL_OK")
</pallas_src>

<mosaic_0001>
module attributes {stable_mosaic.version = 11 : i64} {
  func.func @_one_hot_packed_kernel(%arg0: i32, %arg1: memref<4x8xi32, #tpu.memory_space<vmem>>, %arg2: memref<8x128xf32, #tpu.memory_space<vmem>>, %arg3: memref<4x128xf32, #tpu.memory_space<vmem>>) attributes {dimension_semantics = [#tpu.dimension_semantics<parallel>], iteration_bounds = array<i64: 1>, scalar_prefetch = 0 : i64, scratch_operands = 0 : i64, tpu.core_type = #tpu.core_type<tc>, window_params = [{transform_indices = @transform_0, window_bounds = array<i64: 4, 8>}, {pipeline_mode = #tpu.pipeline_mode<synchronous>, transform_indices = @transform_1, window_bounds = array<i64: 8, 128>}, {transform_indices = @transform_2, window_bounds = array<i64: 4, 128>}]} {
    %c0 = arith.constant 0 : index
    %c0_0 = arith.constant 0 : index
    %0 = vector.load %arg1[%c0, %c0_0] : memref<4x8xi32, #tpu.memory_space<vmem>>, vector<4x8xi32>
    %1 = arith.sitofp %0 : vector<4x8xi32> to vector<4x8xf32>
    %c0_1 = arith.constant 0 : index
    %c0_2 = arith.constant 0 : index
    %2 = vector.load %arg2[%c0_1, %c0_2] : memref<8x128xf32, #tpu.memory_space<vmem>>, vector<8x128xf32>
    %cst = arith.constant dense<0.000000e+00> : vector<4x128xf32>
    %3 = tpu.matmul %1, %2, %cst {dimension_numbers = #tpu.dot_dimension_numbers<[1], [0], [0], [1], [0, 0, 1, 1], [], []>} : vector<4x8xf32>, vector<8x128xf32>, vector<4x128xf32> -> vector<4x128xf32>
    %4 = tpu.iota {dimensions = array<i32: 1>} : vector<4x128xi32>
    %5 = arith.fptosi %3 : vector<4x128xf32> to vector<4x128xi32>
    %6 = arith.cmpi eq, %4, %5 : vector<4x128xi32>
    %7 = arith.extui %6 : vector<4x128xi1> to vector<4x128xi32>
    %8 = arith.sitofp %7 : vector<4x128xi32> to vector<4x128xf32>
    %c0_3 = arith.constant 0 : index
    %c0_4 = arith.constant 0 : index
    %9 = vector.load %arg3[%c0_3, %c0_4] : memref<4x128xf32, #tpu.memory_space<vmem>>, vector<4x128xf32>
    tpu.vector_store %arg3[%c0_3, %c0_4], %8 {strides = array<i32>} : memref<4x128xf32, #tpu.memory_space<vmem>>, vector<4x128xf32>,
    return
  }
  func.func @transform_0(%arg0: i32) -> (i32, i32) {
    %c0_i32 = arith.constant 0 : i32
    %c0_i32_0 = arith.constant 0 : i32
    return %arg0, %c0_i32 : i32, i32
  }
  func.func @transform_1(%arg0: i32) -> (i32, i32) {
    %c0_i32 = arith.constant 0 : i32
    %c0_i32_0 = arith.constant 0 : i32
    %c0_i32_1 = arith.constant 0 : i32
    return %c0_i32, %c0_i32_0 : i32, i32
  }
  func.func @transform_2(%arg0: i32) -> (i32, i32) {
    %c0_i32 = arith.constant 0 : i32
    %c0_i32_0 = arith.constant 0 : i32
    return %arg0, %c0_i32 : i32, i32
  }
}

</mosaic_0001>

<llo_original>
// kernel: tpu_custom_call.1
$region0: #{tpu_custom_call.1}
  #allocation0 [shape = 'u32[]', space=smem, size = 0x4, offset = 0x4, fixed_abs, tag = 'smem constant byte address 0x4 - core index']
  #allocation1 [shape = 'u32[144,128]{1,0:T(1,128)}', space=vmem, size = 0x12000, scoped, tag = 'internal scratch']
  %s0 = inlined_call_operand.hbm [shape: s32[4,8], index: 0, kind: input, shape index: {}]
  %s1 = inlined_call_operand.hbm [shape: f32[8,128], index: 1, kind: input, shape index: {}]
  %s2 = inlined_call_operand.hbm [shape: f32[4,128], index: 2, kind: output, shape index: {}]
  %s3 = sld [smem:[#allocation0]]
  $region26: #{tpu_custom_call.1} parent=0
    _
  %s5 = ssub.s32 1, %s3
  %s6 = scalar_select 0, %s5, %s3
  $region1: #{tpu_custom_call.1} parent=0
    #allocation2 [shape = 'u8[2048]{0}', space=vmem, size = 0x800, scoped, tag = 'input window, operand 0, single buffered']
    #allocation3 [shape = 's32[1]{0}', space=sflag, size = 0x4, scoped, tag = 'scoped memory for tpu_custom_call.1']
    #allocation4 [shape = 's32[1]{0}', space=sflag, size = 0x4, scoped, tag = 'scoped memory for tpu_custom_call.1']
    #allocation5 [shape = 'u8[4096]{0}', space=vmem, size = 0x1000, scoped, tag = 'input window, operand 1, single buffered']
    #allocation6 [shape = 's32[1]{0}', space=sflag, size = 0x4, scoped, tag = 'scoped memory for tpu_custom_call.1']
    #allocation7 [shape = 'u8[2048]{0}', space=vmem, size = 0x800, scoped, tag = 'output window, operand 0, single buffered']
    %7 = vsyncpa [#allocation3], 0
    %8 = vsyncpa [#allocation6], 0
    %9 = vsyncpa [#allocation4], 0
    // Predicated region
    $region2: #{tpu_custom_call.1} parent=1 // pred_check
      _
    $region3: #{tpu_custom_call.1} parent=1 // pred_check_branch
      %11 = sbr.rel (0) target = $region5
    $region4: #{tpu_custom_call.1} parent=1 // pred_region
      %s13 = ssub.s32 64, 64
      %14 = vsyncadd [#allocation3], %s13
      %s16 = sshll.u32 [#allocation2], 4
      %s17 = int_to_ptr.vmem [resolvable:$true] %s16
      %19 = dma.hbm_to_vmem [thread:$0]  %s0, 64, %s17, [#allocation3]
    $region5: #{tpu_custom_call.1} parent=1 // pred_fallthru
      _
    // Predicated region
    $region6: #{tpu_custom_call.1} parent=1 // pred_check
      _
    $region7: #{tpu_custom_call.1} parent=1 // pred_check_branch
      %21 = sbr.rel (0) target = $region9
    $region8: #{tpu_custom_call.1} parent=1 // pred_region
      %s23 = ssub.s32 128, 128
      %24 = vsyncadd [#allocation6], %s23
      %s26 = sshll.u32 [#allocation5], 4
      %s27 = int_to_ptr.vmem [resolvable:$true] %s26
      %29 = dma.hbm_to_vmem [thread:$0]  %s1, 128, %s27, [#allocation6]
    $region9: #{tpu_custom_call.1} parent=1 // pred_fallthru
      _
    // Predicated region
    $region10: #{tpu_custom_call.1} parent=1 // pred_check
      _
    $region11: #{tpu_custom_call.1} parent=1 // pred_check_branch
      %31 = sbr.rel (0) target = $region13
    $region12: #{tpu_custom_call.1} parent=1 // pred_region
      %32 = dma.done [#allocation3], 64
    $region13: #{tpu_custom_call.1} parent=1 // pred_fallthru
      _
    // Predicated region
    $region14: #{tpu_custom_call.1} parent=1 // pred_check
      _
    $region15: #{tpu_custom_call.1} parent=1 // pred_check_branch
      %34 = sbr.rel (0) target = $region17
    $region16: #{tpu_custom_call.1} parent=1 // pred_region
      %35 = dma.done [#allocation6], 128
    $region17: #{tpu_custom_call.1} parent=1 // pred_fallthru
      _
    %v36 = vld [vmem:[#allocation2] sm:$0xf]
    %v37 = vcvt.s32.f32 %v36
    %v38 = vld [vmem:[#allocation5] sm:$0xff]
    %vm39 = vcmask 64512
    %v41 = vsel %vm39, %v37, 0
    %43 = vmatprep.subr.mxu0 0.0
    %44 = vmatpush1.msra.mxu0 %v38
    %45 = vmatprep.subr.mxu0 0.0
    %46 = vmatpush1.msra.mxu0 0.0
    %47 = vmatprep.subr.mxu0 0.0
    %48 = vmatpush1.msra.mxu0 0.0
    %49 = vmatprep.subr.mxu0 0.0
    %50 = vmatpush1.msra.mxu0 0.0
    %51 = vmatprep.subr.mxu0 0.0
    %52 = vmatpush1.msra.mxu0 0.0
    %53 = vmatprep.subr.mxu0 0.0
    %54 = vmatpush1.msra.mxu0 0.0
    %55 = vmatprep.subr.mxu0 0.0
    %56 = vmatpush1.msra.mxu0 0.0
    %57 = vmatprep.subr.mxu0 0.0
    %58 = vmatpush1.msra.mxu0 0.0
    %59 = vmatprep.subr.mxu0 0.0
    %60 = vmatpush1.msra.mxu0 0.0
    %61 = vmatprep.subr.mxu0 0.0
    %62 = vmatpush1.msra.mxu0 0.0
    %63 = vmatprep.subr.mxu0 0.0
    %64 = vmatpush1.msra.mxu0 0.0
    %65 = vmatprep.subr.mxu0 0.0
    %66 = vmatpush1.msra.mxu0 0.0
    %67 = vmatprep.subr.mxu0 0.0
    %68 = vmatpush1.msra.mxu0 0.0
    %69 = vmatprep.subr.mxu0 0.0
    %70 = vmatpush1.msra.mxu0 0.0
    %71 = vmatprep.subr.mxu0 0.0
    %72 = vmatpush1.msra.mxu0 0.0
    %73 = vmatprep.subr.mxu0 0.0
    %74 = vmatpush1.msra.mxu0 0.0
    %75 = vmatprep.subr.mxu0 0.0
    %76 = vmatpush1.msra.mxu0 0.0
    %77 = vmatprep.subr.mxu0 0.0
    %78 = vmatpush1.msra.mxu0 0.0
    %79 = vmatprep.subr.mxu0 0.0
    %80 = vmatpush1.msra.mxu0 0.0
    %81 = vmatprep.subr.mxu0 0.0
    %82 = vmatpush1.msra.mxu0 0.0
    %83 = vmatprep.subr.mxu0 0.0
    %84 = vmatpush1.msra.mxu0 0.0
    %85 = vmatprep.subr.mxu0 0.0
    %86 = vmatpush1.msra.mxu0 0.0
    %87 = vmatprep.subr.mxu0 0.0
    %88 = vmatpush1.msra.mxu0 0.0
    %89 = vmatprep.subr.mxu0 0.0
    %90 = vmatpush1.msra.mxu0 0.0
    %91 = vmatprep.subr.mxu0 0.0
    %92 = vmatpush1.msra.mxu0 0.0
    %93 = vmatprep.subr.mxu0 0.0
    %94 = vmatpush1.msra.mxu0 0.0
    %95 = vmatprep.subr.mxu0 0.0
    %96 = vmatpush1.msra.mxu0 0.0
    %97 = vmatprep.subr.mxu0 0.0
    %98 = vmatpush1.msra.mxu0 0.0
    %99 = vmatprep.subr.mxu0 0.0
    %100 = vmatpush1.msra.mxu0 0.0
    %101 = vmatprep.subr.mxu0 0.0
    %102 = vmatpush1.msra.mxu0 0.0
    %103 = vmatprep.subr.mxu0 0.0
    %104 = vmatpush1.msra.mxu0 0.0
    %105 = vmatprep.subr.mxu0 0.0
    %106 = vmatpush1.msra.mxu0 0.0
    %107 = vmatprep.mubr.f32.mxu0 0.0
    %108 = vmatmul.mubr.f32.gmra.mrb[0].mxu0 %v41
    %v109 = vpop.f32.mrb[0].mxu0
    %v110 = vadd.f32 0.0, %v109
    %v111 = vpop.f32.mrb[0].mxu0
    %112 = vdwg.mxu0
    %v113 = vlaneseq
    %v114 = vand.u32 %v113, 127
    %v115 = vcvt.f32.s32.to.zero.pseudo %v110
    %vm116 = vcmp.eq.s32.totalorder %v114, %v115
    %v117 = vsel %vm116, 1, 0
    %v118 = vcvt.s32.f32 %v117
    %119 = vst [vmem:[#allocation7] sm:$0xf] %v118
    // Predicated region
    $region18: #{tpu_custom_call.1} parent=1 // pred_check
      _
    $region19: #{tpu_custom_call.1} parent=1 // pred_check_branch
      %121 = sbr.rel (0) target = $region21
    $region20: #{tpu_custom_call.1} parent=1 // pred_region
      %s123 = ssub.s32 64, 64
      %124 = vsyncadd [#allocation4], %s123
      %s126 = sshll.u32 [#allocation7], 4
      %s127 = int_to_ptr.vmem [resolvable:$true] %s126
      %129 = dma.vmem_to_hbm [thread:$0]  %s127, 64, %s2, [#allocation4]
    $region21: #{tpu_custom_call.1} parent=1 // pred_fallthru
      _
    // Predicated region
    $region22: #{tpu_custom_call.1} parent=1 // pred_check
      _
    $region23: #{tpu_custom_call.1} parent=1 // pred_check_branch
      %131 = sbr.rel (0) target = $region25
    $region24: #{tpu_custom_call.1} parent=1 // pred_region
      %132 = dma.done [#allocation4], 64
    $region25: #{tpu_custom_call.1} parent=1 // pred_fallthru
      _
    %133 = vsyncpa [#allocation3], 1
    %134 = vsyncpa [#allocation6], 1
    %135 = vsyncpa [#allocation4], 1

</llo_original>
